<compile_context>
chip_gen: v5e
topology: v5e:2x2
jax: 0.10.0
libtpu: 0.0.40
codegen_flags: <defaults>
</compile_context>

<pallas_src>
import functools

import numpy as np
import jax
import jax.numpy as jnp
from jax.experimental import pallas as pl
from jax.experimental.pallas import tpu as pltpu


def _bottleneck_kernel(W, x_ref, mask_ref, w1_ref, b1_ref, w2_ref, b2_ref,
                       w3_ref, b3_ref, o_ref, patches_ref):
    P = w1_ref.shape[0]
    N = x_ref.shape[1]                      # lanes this step = H*W (one image)

    # conv1 (1x1, bn1 scale folded into w1) + bias + relu. bf16 MXU, f32 epilogue.
    h1 = jnp.dot(w1_ref[...], x_ref[...].astype(jnp.bfloat16),
                 preferred_element_type=jnp.float32)
    h1 = jnp.maximum(h1 + b1_ref[...], 0.0)                  # (P, N) f32

    # conv2 (3x3, stride=1, pad=1, bn2 folded) as ONE im2col matmul with K = 9*P.
    # Tap (dh, dw) = XLU roll of the flattened image by dh*W+dw; lanes whose source
    # would be outside the image (incl. circular wrap) are zeroed by the precomputed
    # per-tap masks. Each masked tap is stored straight into the VMEM scratch so only
    # one tap is live in vregs at a time.
    m = 0                                                    # non-center tap counter
    for dh in (-1, 0, 1):
        for dw in (-1, 0, 1):
            t = (dh + 1) * 3 + (dw + 1)                      # tap index (matches w2f)
            if dh == 0 and dw == 0:
                patches_ref[t * P:(t + 1) * P, :] = h1       # center tap, always valid
            else:
                d = dh * W + dw
                shifted = pltpu.roll(h1, shift=(-d) % N, axis=1)   # h1[:, g + d]
                patches_ref[t * P:(t + 1) * P, :] = shifted * mask_ref[m:m + 1, :]
                m += 1

    h2 = jnp.dot(w2_ref[...], patches_ref[...].astype(jnp.bfloat16),
                 preferred_element_type=jnp.float32)
    h2 = jnp.maximum(h2 + b2_ref[...], 0.0)                  # (P, N)

    # conv3 (1x1, bn3 folded) + bias + residual add + relu. x re-read here so the
    # (Cin, N) activation is not pinned across the register-hungry im2col region.
    h3 = jnp.dot(w3_ref[...], h2.astype(jnp.bfloat16),
                 preferred_element_type=jnp.float32)
    h3 = h3 + b3_ref[...]
    o_ref[...] = jnp.maximum(h3 + x_ref[...].astype(jnp.float32),
                             0.0).astype(o_ref.dtype)


@jax.jit
def bottleneck_pallas(x, w1, s1, b1, w2, s2, b2, w3, s3, b3):
    """x: (B, Cin, H, W) NCHW. w1: (Cin, P); w2: (3,3,P,P) HWIO; w3: (P, Cout).
    s*/b*: folded BatchNorm scale/bias per channel, shape (C,)."""
    B, Cin, H, W = x.shape
    P = w1.shape[1]
    Cout = w3.shape[1]
    HW = H * W
    assert Cin == Cout, (
        "residual path requires inplanes == planes*4 (stride=1, downsample=None)")
    assert HW % 128 == 0, "lane-dense layout requires H*W to be a multiple of 128"

    # Fold BN scales into conv weights (per output channel); keep biases separate.
    # Weights feed the MXU as bf16; accumulation stays f32.
    w1f = (w1 * s1[None, :]).T.astype(jnp.bfloat16)                        # (P, Cin)
    w2f = (jnp.transpose(w2, (3, 0, 1, 2)) * s2[:, None, None, None]
           ).reshape(P, 9 * P).astype(jnp.bfloat16)                        # (P, 9P)
    w3f = (w3 * s3[None, :]).T.astype(jnp.bfloat16)                        # (Cout, P)
    b1c = b1.reshape(P, 1).astype(jnp.float32)
    b2c = b2.reshape(P, 1).astype(jnp.float32)
    b3c = b3.reshape(Cout, 1).astype(jnp.float32)

    # Precompute the 8 non-center tap validity masks (float 0/1) once, as constants.
    g = np.arange(HW, dtype=np.int32)
    hh, ww = g // W, g % W
    rows = []
    for dh in (-1, 0, 1):
        for dw in (-1, 0, 1):
            if dh == 0 and dw == 0:
                continue
            ok = ((hh + dh >= 0) & (hh + dh < H) & (ww + dw >= 0) & (ww + dw < W))
            rows.append(ok.astype(np.float32))
    mask = np.stack(rows, axis=0)                                          # (8, HW)

    # Channels-in-sublanes / flattened (b,h,w)-in-lanes layout (lane-dense I/O).
    xT = x.transpose(1, 0, 2, 3).reshape(Cin, B * HW)

    grid_spec = pltpu.PrefetchScalarGridSpec(
        num_scalar_prefetch=0,
        grid=(B,),                                            # one image per step
        in_specs=[
            pl.BlockSpec((Cin, HW), lambda b: (0, b)),        # x: one image tile
            pl.BlockSpec((8, HW), lambda b: (0, 0)),          # tap masks
            pl.BlockSpec((P, Cin), lambda b: (0, 0)),         # w1 (bn1 folded, bf16)
            pl.BlockSpec((P, 1), lambda b: (0, 0)),           # b1
            pl.BlockSpec((P, 9 * P), lambda b: (0, 0)),       # w2 (bn2 folded, bf16)
            pl.BlockSpec((P, 1), lambda b: (0, 0)),           # b2
            pl.BlockSpec((Cout, P), lambda b: (0, 0)),        # w3 (bn3 folded, bf16)
            pl.BlockSpec((Cout, 1), lambda b: (0, 0)),        # b3
        ],
        out_specs=pl.BlockSpec((Cout, HW), lambda b: (0, b)),
        scratch_shapes=[pltpu.VMEM((9 * P, HW), jnp.float32)],  # im2col buffer
    )

    out = pl.pallas_call(
        functools.partial(_bottleneck_kernel, W),
        out_shape=jax.ShapeDtypeStruct((Cout, B * HW), x.dtype),
        grid_spec=grid_spec,
        compiler_params=pltpu.CompilerParams(
            dimension_semantics=("parallel",)),               # use both TCs on v7x
    )(xT, mask, w1f, b1c, w2f, b2c, w3f, b3c)

    return out.reshape(Cout, B, H, W).transpose(1, 0, 2, 3)


def fold_bn(gamma, beta, mean, var, eps=1e-5):
    scale = gamma / jnp.sqrt(var + eps)
    bias = beta - mean * scale
    return scale, bias


def reference_jax(x, w1, s1, b1, w2, s2, b2, w3, s3, b3):
    dn = ('NCHW', 'HWIO', 'NCHW')
    Cin, P = w1.shape
    Cout = w3.shape[1]
    hi = jax.lax.Precision.HIGHEST

    def bn(h, s, b):
        return h * s.reshape(1, -1, 1, 1) + b.reshape(1, -1, 1, 1)

    h = jax.lax.conv_general_dilated(x, w1.reshape(1, 1, Cin, P), (1, 1), 'VALID',
                                     dimension_numbers=dn, precision=hi)
    h = jnp.maximum(bn(h, s1, b1), 0.0)
    h = jax.lax.conv_general_dilated(h, w2, (1, 1), 'SAME',
                                     dimension_numbers=dn, precision=hi)
    h = jnp.maximum(bn(h, s2, b2), 0.0)
    h = jax.lax.conv_general_dilated(h, w3.reshape(1, 1, P, Cout), (1, 1), 'VALID',
                                     dimension_numbers=dn, precision=hi)
    h = bn(h, s3, b3)
    return jnp.maximum(h + x, 0.0)


if __name__ == "__main__":
    # Shapes consistent with the module: Bottleneck(inplanes=32, planes=8),
    # stride=1, downsample=None  =>  inplanes == planes * expansion (4).
    B, H, W = 2, 16, 16
    planes = 8
    inplanes = planes * 4          # 32
    cout = planes * 4              # 32

    key = jax.random.PRNGKey(0)
    ks = jax.random.split(key, 8)

    x = jax.random.normal(ks[0], (B, inplanes, H, W), jnp.float32)   # NCHW like PyTorch

    # conv weights: 1x1 as (Cin, Cout); 3x3 as HWIO
    w1 = 0.1 * jax.random.normal(ks[1], (inplanes, planes), jnp.float32)
    w2 = 0.1 * jax.random.normal(ks[2], (3, 3, planes, planes), jnp.float32)
    w3 = 0.1 * jax.random.normal(ks[3], (planes, cout), jnp.float32)

    # batchnorm params (inference mode, running stats)
    def bn_params(k, c):
        k1, k2, k3, k4 = jax.random.split(k, 4)
        gamma = 1.0 + 0.1 * jax.random.normal(k1, (c,), jnp.float32)
        beta = 0.1 * jax.random.normal(k2, (c,), jnp.float32)
        mean = 0.1 * jax.random.normal(k3, (c,), jnp.float32)
        var = 0.5 + jnp.abs(jax.random.normal(k4, (c,), jnp.float32))
        return gamma, beta, mean, var

    s1, b1 = fold_bn(*bn_params(ks[4], planes))
    s2, b2 = fold_bn(*bn_params(ks[5], planes))
    s3, b3 = fold_bn(*bn_params(ks[6], cout))

    out = bottleneck_pallas(x, w1, s1, b1, w2, s2, b2, w3, s3, b3)
    out = jax.block_until_ready(out)

    ref = reference_jax(x, w1, s1, b1, w2, s2, b2, w3, s3, b3)
    assert out.shape == (B, cout, H, W)
    err = float(jnp.max(jnp.abs(out - ref)))
    # bf16 MXU operands vs HIGHEST-precision f32 reference => looser tolerance.
    assert jnp.allclose(out, ref, atol=5e-2, rtol=5e-2), err

    print("KERNEL_OK")
</pallas_src>

<mosaic_0001>
module attributes {stable_mosaic.version = 11 : i64} {
  func.func @_bottleneck_kernel(%arg0: i32, %arg1: memref<32x256xf32, #tpu.memory_space<vmem>>, %arg2: memref<8x256xf32, #tpu.memory_space<vmem>>, %arg3: memref<8x32xbf16, #tpu.memory_space<vmem>>, %arg4: memref<8x1xf32, #tpu.memory_space<vmem>>, %arg5: memref<8x72xbf16, #tpu.memory_space<vmem>>, %arg6: memref<8x1xf32, #tpu.memory_space<vmem>>, %arg7: memref<32x8xbf16, #tpu.memory_space<vmem>>, %arg8: memref<32x1xf32, #tpu.memory_space<vmem>>, %arg9: memref<32x256xf32, #tpu.memory_space<vmem>>, %arg10: memref<72x256xf32, #tpu.memory_space<vmem>>) attributes {dimension_semantics = [#tpu.dimension_semantics<parallel>], iteration_bounds = array<i64: 2>, scalar_prefetch = 0 : i64, scratch_operands = 1 : i64, tpu.core_type = #tpu.core_type<tc>, window_params = [{transform_indices = @transform_0, window_bounds = array<i64: 32, 256>}, {pipeline_mode = #tpu.pipeline_mode<synchronous>, transform_indices = @transform_1, window_bounds = array<i64: 8, 256>}, {pipeline_mode = #tpu.pipeline_mode<synchronous>, transform_indices = @transform_2, window_bounds = array<i64: 8, 32>}, {pipeline_mode = #tpu.pipeline_mode<synchronous>, transform_indices = @transform_3, window_bounds = array<i64: 8, 1>}, {pipeline_mode = #tpu.pipeline_mode<synchronous>, transform_indices = @transform_4, window_bounds = array<i64: 8, 72>}, {pipeline_mode = #tpu.pipeline_mode<synchronous>, transform_indices = @transform_5, window_bounds = array<i64: 8, 1>}, {pipeline_mode = #tpu.pipeline_mode<synchronous>, transform_indices = @transform_6, window_bounds = array<i64: 32, 8>}, {pipeline_mode = #tpu.pipeline_mode<synchronous>, transform_indices = @transform_7, window_bounds = array<i64: 32, 1>}, {transform_indices = @transform_8, window_bounds = array<i64: 32, 256>}]} {
    %c0 = arith.constant 0 : index
    %c0_0 = arith.constant 0 : index
    %0 = vector.load %arg3[%c0, %c0_0] : memref<8x32xbf16, #tpu.memory_space<vmem>>, vector<8x32xbf16>
    %c0_1 = arith.constant 0 : index
    %c0_2 = arith.constant 0 : index
    %1 = vector.load %arg1[%c0_1, %c0_2] : memref<32x256xf32, #tpu.memory_space<vmem>>, vector<32x256xf32>
    %2 = arith.truncf %1 : vector<32x256xf32> to vector<32x256xbf16>
    %cst = arith.constant dense<0.000000e+00> : vector<8x256xf32>
    %3 = tpu.matmul %0, %2, %cst {dimension_numbers = #tpu.dot_dimension_numbers<[1], [0], [0], [1], [0, 0, 1, 1], [], []>} : vector<8x32xbf16>, vector<32x256xbf16>, vector<8x256xf32> -> vector<8x256xf32>
    %c0_3 = arith.constant 0 : index
    %c0_4 = arith.constant 0 : index
    %4 = vector.load %arg4[%c0_3, %c0_4] : memref<8x1xf32, #tpu.memory_space<vmem>>, vector<8x1xf32>
    %5 = vector.broadcast %4 : vector<8x1xf32> to vector<8x256xf32>
    %6 = arith.addf %3, %5 : vector<8x256xf32>
    %cst_5 = arith.constant 0.000000e+00 : f32
    %7 = vector.broadcast %cst_5 : f32 to vector<8x256xf32>
    %8 = arith.maximumf %6, %7 : vector<8x256xf32>
    %c17_i32 = arith.constant 17 : i32
    %9 = tpu.dynamic_rotate %8 by %c17_i32 dim 1 : vector<8x256xf32>, i32 -> vector<8x256xf32>
    %c0_6 = arith.constant 0 : index
    %c0_7 = arith.constant 0 : index
    %10 = vector.load %arg2[%c0_6, %c0_7] : memref<8x256xf32, #tpu.memory_space<vmem>>, vector<1x256xf32>
    %11 = vector.broadcast %10 : vector<1x256xf32> to vector<8x256xf32>
    %12 = arith.mulf %9, %11 : vector<8x256xf32>
    %c0_8 = arith.constant 0 : index
    %c0_9 = arith.constant 0 : index
    %13 = vector.load %arg10[%c0_8, %c0_9] : memref<72x256xf32, #tpu.memory_space<vmem>>, vector<8x256xf32>
    tpu.vector_store %arg10[%c0_8, %c0_9], %12 {strides = array<i32>} : memref<72x256xf32, #tpu.memory_space<vmem>>, vector<8x256xf32>,
    %c16_i32 = arith.constant 16 : i32
    %14 = tpu.dynamic_rotate %8 by %c16_i32 dim 1 : vector<8x256xf32>, i32 -> vector<8x256xf32>
    %c1 = arith.constant 1 : index
    %c0_10 = arith.constant 0 : index
    %15 = vector.load %arg2[%c1, %c0_10] : memref<8x256xf32, #tpu.memory_space<vmem>>, vector<1x256xf32>
    %16 = vector.broadcast %15 : vector<1x256xf32> to vector<8x256xf32>
    %17 = arith.mulf %14, %16 : vector<8x256xf32>
    %c8 = arith.constant 8 : index
    %c0_11 = arith.constant 0 : index
    %18 = vector.load %arg10[%c8, %c0_11] : memref<72x256xf32, #tpu.memory_space<vmem>>, vector<8x256xf32>
    tpu.vector_store %arg10[%c8, %c0_11], %17 {strides = array<i32>} : memref<72x256xf32, #tpu.memory_space<vmem>>, vector<8x256xf32>,
    %c15_i32 = arith.constant 15 : i32
    %19 = tpu.dynamic_rotate %8 by %c15_i32 dim 1 : vector<8x256xf32>, i32 -> vector<8x256xf32>
    %c2 = arith.constant 2 : index
    %c0_12 = arith.constant 0 : index
    %20 = vector.load %arg2[%c2, %c0_12] : memref<8x256xf32, #tpu.memory_space<vmem>>, vector<1x256xf32>
    %21 = vector.broadcast %20 : vector<1x256xf32> to vector<8x256xf32>
    %22 = arith.mulf %19, %21 : vector<8x256xf32>
    %c16 = arith.constant 16 : index
    %c0_13 = arith.constant 0 : index
    %23 = vector.load %arg10[%c16, %c0_13] : memref<72x256xf32, #tpu.memory_space<vmem>>, vector<8x256xf32>
    tpu.vector_store %arg10[%c16, %c0_13], %22 {strides = array<i32>} : memref<72x256xf32, #tpu.memory_space<vmem>>, vector<8x256xf32>,
    %c1_i32 = arith.constant 1 : i32
    %24 = tpu.dynamic_rotate %8 by %c1_i32 dim 1 : vector<8x256xf32>, i32 -> vector<8x256xf32>
    %c3 = arith.constant 3 : index
    %c0_14 = arith.constant 0 : index
    %25 = vector.load %arg2[%c3, %c0_14] : memref<8x256xf32, #tpu.memory_space<vmem>>, vector<1x256xf32>
    %26 = vector.broadcast %25 : vector<1x256xf32> to vector<8x256xf32>
    %27 = arith.mulf %24, %26 : vector<8x256xf32>
    %c24 = arith.constant 24 : index
    %c0_15 = arith.constant 0 : index
    %28 = vector.load %arg10[%c24, %c0_15] : memref<72x256xf32, #tpu.memory_space<vmem>>, vector<8x256xf32>
    tpu.vector_store %arg10[%c24, %c0_15], %27 {strides = array<i32>} : memref<72x256xf32, #tpu.memory_space<vmem>>, vector<8x256xf32>,
    %c32 = arith.constant 32 : index
    %c0_16 = arith.constant 0 : index
    %29 = vector.load %arg10[%c32, %c0_16] : memref<72x256xf32, #tpu.memory_space<vmem>>, vector<8x256xf32>
    tpu.vector_store %arg10[%c32, %c0_16], %8 {strides = array<i32>} : memref<72x256xf32, #tpu.memory_space<vmem>>, vector<8x256xf32>,
    %c255_i32 = arith.constant 255 : i32
    %30 = tpu.dynamic_rotate %8 by %c255_i32 dim 1 : vector<8x256xf32>, i32 -> vector<8x256xf32>
    %c4 = arith.constant 4 : index
    %c0_17 = arith.constant 0 : index
    %31 = vector.load %arg2[%c4, %c0_17] : memref<8x256xf32, #tpu.memory_space<vmem>>, vector<1x256xf32>
    %32 = vector.broadcast %31 : vector<1x256xf32> to vector<8x256xf32>
    %33 = arith.mulf %30, %32 : vector<8x256xf32>
    %c40 = arith.constant 40 : index
    %c0_18 = arith.constant 0 : index
    %34 = vector.load %arg10[%c40, %c0_18] : memref<72x256xf32, #tpu.memory_space<vmem>>, vector<8x256xf32>
    tpu.vector_store %arg10[%c40, %c0_18], %33 {strides = array<i32>} : memref<72x256xf32, #tpu.memory_space<vmem>>, vector<8x256xf32>,
    %c241_i32 = arith.constant 241 : i32
    %35 = tpu.dynamic_rotate %8 by %c241_i32 dim 1 : vector<8x256xf32>, i32 -> vector<8x256xf32>
    %c5 = arith.constant 5 : index
    %c0_19 = arith.constant 0 : index
    %36 = vector.load %arg2[%c5, %c0_19] : memref<8x256xf32, #tpu.memory_space<vmem>>, vector<1x256xf32>
    %37 = vector.broadcast %36 : vector<1x256xf32> to vector<8x256xf32>
    %38 = arith.mulf %35, %37 : vector<8x256xf32>
    %c48 = arith.constant 48 : index
    %c0_20 = arith.constant 0 : index
    %39 = vector.load %arg10[%c48, %c0_20] : memref<72x256xf32, #tpu.memory_space<vmem>>, vector<8x256xf32>
    tpu.vector_store %arg10[%c48, %c0_20], %38 {strides = array<i32>} : memref<72x256xf32, #tpu.memory_space<vmem>>, vector<8x256xf32>,
    %c240_i32 = arith.constant 240 : i32
    %40 = tpu.dynamic_rotate %8 by %c240_i32 dim 1 : vector<8x256xf32>, i32 -> vector<8x256xf32>
    %c6 = arith.constant 6 : index
    %c0_21 = arith.constant 0 : index
    %41 = vector.load %arg2[%c6, %c0_21] : memref<8x256xf32, #tpu.memory_space<vmem>>, vector<1x256xf32>
    %42 = vector.broadcast %41 : vector<1x256xf32> to vector<8x256xf32>
    %43 = arith.mulf %40, %42 : vector<8x256xf32>
    %c56 = arith.constant 56 : index
    %c0_22 = arith.constant 0 : index
    %44 = vector.load %arg10[%c56, %c0_22] : memref<72x256xf32, #tpu.memory_space<vmem>>, vector<8x256xf32>
    tpu.vector_store %arg10[%c56, %c0_22], %43 {strides = array<i32>} : memref<72x256xf32, #tpu.memory_space<vmem>>, vector<8x256xf32>,
    %c239_i32 = arith.constant 239 : i32
    %45 = tpu.dynamic_rotate %8 by %c239_i32 dim 1 : vector<8x256xf32>, i32 -> vector<8x256xf32>
    %c7 = arith.constant 7 : index
    %c0_23 = arith.constant 0 : index
    %46 = vector.load %arg2[%c7, %c0_23] : memref<8x256xf32, #tpu.memory_space<vmem>>, vector<1x256xf32>
    %47 = vector.broadcast %46 : vector<1x256xf32> to vector<8x256xf32>
    %48 = arith.mulf %45, %47 : vector<8x256xf32>
    %c64 = arith.constant 64 : index
    %c0_24 = arith.constant 0 : index
    %49 = vector.load %arg10[%c64, %c0_24] : memref<72x256xf32, #tpu.memory_space<vmem>>, vector<8x256xf32>
    tpu.vector_store %arg10[%c64, %c0_24], %48 {strides = array<i32>} : memref<72x256xf32, #tpu.memory_space<vmem>>, vector<8x256xf32>,
    %c0_25 = arith.constant 0 : index
    %c0_26 = arith.constant 0 : index
    %50 = vector.load %arg5[%c0_25, %c0_26] : memref<8x72xbf16, #tpu.memory_space<vmem>>, vector<8x72xbf16>
    %c0_27 = arith.constant 0 : index
    %c0_28 = arith.constant 0 : index
    %51 = vector.load %arg10[%c0_27, %c0_28] : memref<72x256xf32, #tpu.memory_space<vmem>>, vector<72x256xf32>
    %52 = arith.truncf %51 : vector<72x256xf32> to vector<72x256xbf16>
    %cst_29 = arith.constant dense<0.000000e+00> : vector<8x256xf32>
    %53 = tpu.matmul %50, %52, %cst_29 {dimension_numbers = #tpu.dot_dimension_numbers<[1], [0], [0], [1], [0, 0, 1, 1], [], []>} : vector<8x72xbf16>, vector<72x256xbf16>, vector<8x256xf32> -> vector<8x256xf32>
    %c0_30 = arith.constant 0 : index
    %c0_31 = arith.constant 0 : index
    %54 = vector.load %arg6[%c0_30, %c0_31] : memref<8x1xf32, #tpu.memory_space<vmem>>, vector<8x1xf32>
    %55 = vector.broadcast %54 : vector<8x1xf32> to vector<8x256xf32>
    %56 = arith.addf %53, %55 : vector<8x256xf32>
    %cst_32 = arith.constant 0.000000e+00 : f32
    %57 = vector.broadcast %cst_32 : f32 to vector<8x256xf32>
    %58 = arith.maximumf %56, %57 : vector<8x256xf32>
    %c0_33 = arith.constant 0 : index
    %c0_34 = arith.constant 0 : index
    %59 = vector.load %arg7[%c0_33, %c0_34] : memref<32x8xbf16, #tpu.memory_space<vmem>>, vector<32x8xbf16>
    %60 = arith.truncf %58 : vector<8x256xf32> to vector<8x256xbf16>
    %cst_35 = arith.constant dense<0.000000e+00> : vector<32x256xf32>
    %61 = tpu.matmul %59, %60, %cst_35 {dimension_numbers = #tpu.dot_dimension_numbers<[1], [0], [0], [1], [0, 0, 1, 1], [], []>} : vector<32x8xbf16>, vector<8x256xbf16>, vector<32x256xf32> -> vector<32x256xf32>
    %c0_36 = arith.constant 0 : index
    %c0_37 = arith.constant 0 : index
    %62 = vector.load %arg8[%c0_36, %c0_37] : memref<32x1xf32, #tpu.memory_space<vmem>>, vector<32x1xf32>
    %63 = vector.broadcast %62 : vector<32x1xf32> to vector<32x256xf32>
    %64 = arith.addf %61, %63 : vector<32x256xf32>
    %c0_38 = arith.constant 0 : index
    %c0_39 = arith.constant 0 : index
    %65 = vector.load %arg1[%c0_38, %c0_39] : memref<32x256xf32, #tpu.memory_space<vmem>>, vector<32x256xf32>
    %66 = arith.addf %64, %65 : vector<32x256xf32>
    %cst_40 = arith.constant 0.000000e+00 : f32
    %67 = vector.broadcast %cst_40 : f32 to vector<32x256xf32>
    %68 = arith.maximumf %66, %67 : vector<32x256xf32>
    %c0_41 = arith.constant 0 : index
    %c0_42 = arith.constant 0 : index
    %69 = vector.load %arg9[%c0_41, %c0_42] : memref<32x256xf32, #tpu.memory_space<vmem>>, vector<32x256xf32>
    tpu.vector_store %arg9[%c0_41, %c0_42], %68 {strides = array<i32>} : memref<32x256xf32, #tpu.memory_space<vmem>>, vector<32x256xf32>,
    return
  }
  func.func @transform_0(%arg0: i32) -> (i32, i32) {
    %c0_i32 = arith.constant 0 : i32
    %c0_i32_0 = arith.constant 0 : i32
    return %c0_i32, %arg0 : i32, i32
  }
  func.func @transform_1(%arg0: i32) -> (i32, i32) {
    %c0_i32 = arith.constant 0 : i32
    %c0_i32_0 = arith.constant 0 : i32
    %c0_i32_1 = arith.constant 0 : i32
    return %c0_i32, %c0_i32_0 : i32, i32
  }
  func.func @transform_2(%arg0: i32) -> (i32, i32) {
    %c0_i32 = arith.constant 0 : i32
    %c0_i32_0 = arith.constant 0 : i32
    %c0_i32_1 = arith.constant 0 : i32
    return %c0_i32, %c0_i32_0 : i32, i32
  }
  func.func @transform_3(%arg0: i32) -> (i32, i32) {
    %c0_i32 = arith.constant 0 : i32
    %c0_i32_0 = arith.constant 0 : i32
    %c0_i32_1 = arith.constant 0 : i32
    return %c0_i32, %c0_i32_0 : i32, i32
  }
  func.func @transform_4(%arg0: i32) -> (i32, i32) {
    %c0_i32 = arith.constant 0 : i32
    %c0_i32_0 = arith.constant 0 : i32
    %c0_i32_1 = arith.constant 0 : i32
    return %c0_i32, %c0_i32_0 : i32, i32
  }
  func.func @transform_5(%arg0: i32) -> (i32, i32) {
    %c0_i32 = arith.constant 0 : i32
    %c0_i32_0 = arith.constant 0 : i32
    %c0_i32_1 = arith.constant 0 : i32
    return %c0_i32, %c0_i32_0 : i32, i32
  }
  func.func @transform_6(%arg0: i32) -> (i32, i32) {
    %c0_i32 = arith.constant 0 : i32
    %c0_i32_0 = arith.constant 0 : i32
    %c0_i32_1 = arith.constant 0 : i32
    return %c0_i32, %c0_i32_0 : i32, i32
  }
  func.func @transform_7(%arg0: i32) -> (i32, i32) {
    %c0_i32 = arith.constant 0 : i32
    %c0_i32_0 = arith.constant 0 : i32
    %c0_i32_1 = arith.constant 0 : i32
    return %c0_i32, %c0_i32_0 : i32, i32
  }
  func.func @transform_8(%arg0: i32) -> (i32, i32) {
    %c0_i32 = arith.constant 0 : i32
    %c0_i32_0 = arith.constant 0 : i32
    return %c0_i32, %arg0 : i32, i32
  }
}

</mosaic_0001>

<llo_original>
// kernel: bottleneck_pallas.1
$region0: #{bottleneck_pallas.1}
  #allocation0 [shape = 'u32[]', space=smem, size = 0x4, offset = 0x4, fixed_abs, tag = 'smem constant byte address 0x4 - core index']
  #allocation1 [shape = 'u32[72,128]{1,0:T(1,128)}', space=vmem, size = 0x9000, scoped, tag = 'internal scratch']
  #allocation2 [shape = 'f32[72,256]{1,0:T(8,128)}', space=vmem, size = 0x12000, scoped, tag = 'scratch operand']
  %s0 = inlined_call_operand.vmem [shape: f32[32,512], index: 0, kind: input, shape index: {}]
  %s1 = inlined_call_operand.vmem [shape: f32[8,256], index: 1, kind: input, shape index: {}]
  %s2 = inlined_call_operand.vmem [shape: bf16[8,32], index: 2, kind: input, shape index: {}]
  %s3 = inlined_call_operand.vmem [shape: f32[8,1], index: 3, kind: input, shape index: {}]
  %s4 = inlined_call_operand.vmem [shape: bf16[8,72], index: 4, kind: input, shape index: {}]
  %s5 = inlined_call_operand.vmem [shape: f32[8,1], index: 5, kind: input, shape index: {}]
  %s6 = inlined_call_operand.vmem [shape: bf16[32,8], index: 6, kind: input, shape index: {}]
  %s7 = inlined_call_operand.vmem [shape: f32[32,1], index: 7, kind: input, shape index: {}]
  %s8 = inlined_call_operand.vmem [shape: f32[32,512], index: 8, kind: output, shape index: {}]
  %s9 = sld [smem:[#allocation0]]
  $region107: #{bottleneck_pallas.1} parent=0
    _
  %s11 = ssub.s32 1, %s9
  %s12 = scalar_select 0, %s11, %s9
  $region1: #{bottleneck_pallas.1} parent=0
    #allocation3 [shape = 'u8[65536]{0}', space=vmem, size = 0x10000, scoped, tag = 'input window, operand 0']
    #allocation4 [shape = 'u8[65536]{0}', space=vmem, size = 0x10000, scoped, tag = 'output window, operand 0']
    loop: start=0, step=1, limit=4
    $region2: #{bottleneck_pallas.1} parent=1 // loop_pre_header
      _
    $region3: #{bottleneck_pallas.1} parent=1 // loop_header
      %s14 = sphi 0, %s18
      %p15 = scmp.ge.s32.totalorder %s14, 4
      %s24 = sphi 0, %s26
      %s27 = sphi 0, %s24
      %s28 = sphi 0, %s27
      %s44 = sphi 0, %s28
      %s48 = sphi 0, %s48
      %s50 = sphi 0, %s48
      %s51 = sphi 0, %s50
      %s65 = sphi 0, %s51
      %s69 = sphi 0, %s69
      %s71 = sphi 0, %s69
      %s72 = sphi 0, %s71
      %s86 = sphi 0, %s72
      %s90 = sphi 0, %s90
      %s92 = sphi 0, %s90
      %s93 = sphi 0, %s92
      %s107 = sphi 0, %s93
      %s111 = sphi 0, %s111
      %s113 = sphi 0, %s111
      %s114 = sphi 0, %s113
      %s128 = sphi 0, %s114
      %s132 = sphi 0, %s132
      %s134 = sphi 0, %s132
      %s135 = sphi 0, %s134
      %s149 = sphi 0, %s135
      %s153 = sphi 0, %s153
      %s155 = sphi 0, %s153
      %s156 = sphi 0, %s155
      %s170 = sphi 0, %s156
      %s174 = sphi 0, %s174
      %s176 = sphi 0, %s174
      %s177 = sphi 0, %s176
      %s191 = sphi 0, %s177
      %s197 = sphi 0, %s199
      %s200 = sphi 0, %s197
      %s201 = sphi 0, %s200
      %s217 = sphi 0, %s201
    $region4: #{bottleneck_pallas.1} parent=1 // loop_header_branch
      %17 = sbr.rel (%p15) target = $region8
    $region5: #{bottleneck_pallas.1} parent=1 // loop_body
      %s19 = ssub.s32 %s14, 1
      %s20 = ssub.s32 %s14, 2
      %s21 = sadd.s32 %s14, 1
      %s22 = ssub.s32 %s14, %s21
      %p23 = scmp.eq.s32.totalorder %s22, 0
      %s25 = sadd.s32 %s24, 1
      %s26 = scalar_select %p23, %s24, %s25
      %p29 = pneg %p23
      %p30 = scmp.eq.s32.totalorder %s14, 1
      %p31 = por %p29, %p30
      %p32 = scmp.ne.s32.totalorder %s24, %s27
      %p33 = scmp.eq.s32.totalorder %s14, 0
      %p34 = por %p32, %p33
      %p35 = scmp.ne.s32.totalorder %s24, %s27
      %p36 = scmp.eq.s32.totalorder %s19, 1
      %p37 = por %p35, %p36
      %p38 = scmp.ne.s32.totalorder %s27, %s28
      %p39 = scmp.eq.s32.totalorder %s19, 0
      %p40 = por %p38, %p39
      %p41 = scmp.ne.s32.totalorder %s27, %s28
      %p42 = scmp.eq.s32.totalorder %s20, 1
      %p43 = por %p41, %p42
      %p45 = scmp.ne.s32.totalorder %s28, %s44
      %p46 = scmp.eq.s32.totalorder %s20, 0
      %p47 = por %p45, %p46
      %s49 = sadd.s32 %s48, 1
      %p52 = scmp.eq.s32.totalorder %s14, 1
      %p53 = scmp.ne.s32.totalorder %s48, %s50
      %p54 = scmp.eq.s32.totalorder %s14, 0
      %p55 = por %p53, %p54
      %p56 = scmp.ne.s32.totalorder %s48, %s50
      %p57 = scmp.eq.s32.totalorder %s19, 1
      %p58 = por %p56, %p57
      %p59 = scmp.ne.s32.totalorder %s50, %s51
      %p60 = scmp.eq.s32.totalorder %s19, 0
      %p61 = por %p59, %p60
      %p62 = scmp.ne.s32.totalorder %s50, %s51
      %p63 = scmp.eq.s32.totalorder %s20, 1
      %p64 = por %p62, %p63
      %p66 = scmp.ne.s32.totalorder %s51, %s65
      %p67 = scmp.eq.s32.totalorder %s20, 0
      %p68 = por %p66, %p67
      %s70 = sadd.s32 %s69, 1
      %p73 = scmp.eq.s32.totalorder %s14, 1
      %p74 = scmp.ne.s32.totalorder %s69, %s71
      %p75 = scmp.eq.s32.totalorder %s14, 0
      %p76 = por %p74, %p75
      %p77 = scmp.ne.s32.totalorder %s69, %s71
      %p78 = scmp.eq.s32.totalorder %s19, 1
      %p79 = por %p77, %p78
      %p80 = scmp.ne.s32.totalorder %s71, %s72
      %p81 = scmp.eq.s32.totalorder %s19, 0
      %p82 = por %p80, %p81
      %p83 = scmp.ne.s32.totalorder %s71, %s72
      %p84 = scmp.eq.s32.totalorder %s20, 1
      %p85 = por %p83, %p84
      %p87 = scmp.ne.s32.totalorder %s72, %s86
      %p88 = scmp.eq.s32.totalorder %s20, 0
      %p89 = por %p87, %p88
      %s91 = sadd.s32 %s90, 1
      %p94 = scmp.eq.s32.totalorder %s14, 1
      %p95 = scmp.ne.s32.totalorder %s90, %s92
      %p96 = scmp.eq.s32.totalorder %s14, 0
      %p97 = por %p95, %p96
      %p98 = scmp.ne.s32.totalorder %s90, %s92
      %p99 = scmp.eq.s32.totalorder %s19, 1
      %p100 = por %p98, %p99
      %p101 = scmp.ne.s32.totalorder %s92, %s93
      %p102 = scmp.eq.s32.totalorder %s19, 0
      %p103 = por %p101, %p102
      %p104 = scmp.ne.s32.totalorder %s92, %s93
      %p105 = scmp.eq.s32.totalorder %s20, 1
      %p106 = por %p104, %p105
      %p108 = scmp.ne.s32.totalorder %s93, %s107
      %p109 = scmp.eq.s32.totalorder %s20, 0
      %p110 = por %p108, %p109
      %s112 = sadd.s32 %s111, 1
      %p115 = scmp.eq.s32.totalorder %s14, 1
      %p116 = scmp.ne.s32.totalorder %s111, %s113
      %p117 = scmp.eq.s32.totalorder %s14, 0
      %p118 = por %p116, %p117
      %p119 = scmp.ne.s32.totalorder %s111, %s113
      %p120 = scmp.eq.s32.totalorder %s19, 1
      %p121 = por %p119, %p120
      %p122 = scmp.ne.s32.totalorder %s113, %s114
      %p123 = scmp.eq.s32.totalorder %s19, 0
      %p124 = por %p122, %p123
      %p125 = scmp.ne.s32.totalorder %s113, %s114
      %p126 = scmp.eq.s32.totalorder %s20, 1
      %p127 = por %p125, %p126
      %p129 = scmp.ne.s32.totalorder %s114, %s128
      %p130 = scmp.eq.s32.totalorder %s20, 0
      %p131 = por %p129, %p130
      %s133 = sadd.s32 %s132, 1
      %p136 = scmp.eq.s32.totalorder %s14, 1
      %p137 = scmp.ne.s32.totalorder %s132, %s134
      %p138 = scmp.eq.s32.totalorder %s14, 0
      %p139 = por %p137, %p138
      %p140 = scmp.ne.s32.totalorder %s132, %s134
      %p141 = scmp.eq.s32.totalorder %s19, 1
      %p142 = por %p140, %p141
      %p143 = scmp.ne.s32.totalorder %s134, %s135
      %p144 = scmp.eq.s32.totalorder %s19, 0
      %p145 = por %p143, %p144
      %p146 = scmp.ne.s32.totalorder %s134, %s135
      %p147 = scmp.eq.s32.totalorder %s20, 1
      %p148 = por %p146, %p147
      %p150 = scmp.ne.s32.totalorder %s135, %s149
      %p151 = scmp.eq.s32.totalorder %s20, 0
      %p152 = por %p150, %p151
      %s154 = sadd.s32 %s153, 1
      %p157 = scmp.eq.s32.totalorder %s14, 1
      %p158 = scmp.ne.s32.totalorder %s153, %s155
      %p159 = scmp.eq.s32.totalorder %s14, 0
      %p160 = por %p158, %p159
      %p161 = scmp.ne.s32.totalorder %s153, %s155
      %p162 = scmp.eq.s32.totalorder %s19, 1
      %p163 = por %p161, %p162
      %p164 = scmp.ne.s32.totalorder %s155, %s156
      %p165 = scmp.eq.s32.totalorder %s19, 0
      %p166 = por %p164, %p165
      %p167 = scmp.ne.s32.totalorder %s155, %s156
      %p168 = scmp.eq.s32.totalorder %s20, 1
      %p169 = por %p167, %p168
      %p171 = scmp.ne.s32.totalorder %s156, %s170
      %p172 = scmp.eq.s32.totalorder %s20, 0
      %p173 = por %p171, %p172
      %s175 = sadd.s32 %s174, 1
      %p178 = scmp.eq.s32.totalorder %s14, 1
      %p179 = scmp.ne.s32.totalorder %s174, %s176
      %p180 = scmp.eq.s32.totalorder %s14, 0
      %p181 = por %p179, %p180
      %p182 = scmp.ne.s32.totalorder %s174, %s176
      %p183 = scmp.eq.s32.totalorder %s19, 1
      %p184 = por %p182, %p183
      %p185 = scmp.ne.s32.totalorder %s176, %s177
      %p186 = scmp.eq.s32.totalorder %s19, 0
      %p187 = por %p185, %p186
      %p188 = scmp.ne.s32.totalorder %s176, %s177
      %p189 = scmp.eq.s32.totalorder %s20, 1
      %p190 = por %p188, %p189
      %p192 = scmp.ne.s32.totalorder %s177, %s191
      %p193 = scmp.eq.s32.totalorder %s20, 0
      %p194 = por %p192, %p193
      %s195 = ssub.s32 %s14, %s21
      %p196 = scmp.eq.s32.totalorder %s195, 0
      %s198 = sadd.s32 %s197, 1
      %s199 = scalar_select %p196, %s197, %s198
      %p202 = pneg %p196
      %p203 = scmp.eq.s32.totalorder %s14, 1
      %p204 = por %p202, %p203
      %p205 = scmp.ne.s32.totalorder %s197, %s200
      %p206 = scmp.eq.s32.totalorder %s14, 0
      %p207 = por %p205, %p206
      %p208 = scmp.ne.s32.totalorder %s197, %s200
      %p209 = scmp.eq.s32.totalorder %s19, 1
      %p210 = por %p208, %p209
      %p211 = scmp.ne.s32.totalorder %s200, %s201
      %p212 = scmp.eq.s32.totalorder %s19, 0
      %p213 = por %p211, %p212
      %p214 = scmp.ne.s32.totalorder %s200, %s201
      %p215 = scmp.eq.s32.totalorder %s20, 1
      %p216 = por %p214, %p215
      %p218 = scmp.ne.s32.totalorder %s201, %s217
      %p219 = scmp.eq.s32.totalorder %s20, 0
      %p220 = por %p218, %p219
      %p221 = scmp.le.s32.totalorder 1, %s14
      %p222 = scmp.lt.s32.totalorder %s14, 3
      %p223 = pnand %p221, %p222
      %p224 = pneg %p223
      // Predicated region
      $region9: #{bottleneck_pallas.1} parent=5 // pred_check
        _
      $region10: #{bottleneck_pallas.1} parent=5 // pred_check_branch
        %226 = sbr.rel (%p223) target = $region12
      $region11: #{bottleneck_pallas.1} parent=5 // pred_region
        %s227 = ssub.s32 %s14, 1
        // Predicated region
        $region13: #{bottleneck_pallas.1} parent=11 // pred_check
          %p228 = pneg %p61
        $region14: #{bottleneck_pallas.1} parent=11 // pred_check_branch
          %230 = sbr.rel (%p228) target = $region16
        $region15: #{bottleneck_pallas.1} parent=11 // pred_region
          _
        $region16: #{bottleneck_pallas.1} parent=11 // pred_fallthru
          _
        // Predicated region
        $region17: #{bottleneck_pallas.1} parent=11 // pred_check
          %p231 = pneg %p82
        $region18: #{bottleneck_pallas.1} parent=11 // pred_check_branch
          %233 = sbr.rel (%p231) target = $region20
        $region19: #{bottleneck_pallas.1} parent=11 // pred_region
          _
        $region20: #{bottleneck_pallas.1} parent=11 // pred_fallthru
          _
        // Predicated region
        $region21: #{bottleneck_pallas.1} parent=11 // pred_check
          %p234 = pneg %p103
        $region22: #{bottleneck_pallas.1} parent=11 // pred_check_branch
          %236 = sbr.rel (%p234) target = $region24
        $region23: #{bottleneck_pallas.1} parent=11 // pred_region
          _
        $region24: #{bottleneck_pallas.1} parent=11 // pred_fallthru
          _
        // Predicated region
        $region25: #{bottleneck_pallas.1} parent=11 // pred_check
          %p237 = pneg %p124
        $region26: #{bottleneck_pallas.1} parent=11 // pred_check_branch
          %239 = sbr.rel (%p237) target = $region28
        $region27: #{bottleneck_pallas.1} parent=11 // pred_region
          _
        $region28: #{bottleneck_pallas.1} parent=11 // pred_fallthru
          _
        // Predicated region
        $region29: #{bottleneck_pallas.1} parent=11 // pred_check
          %p240 = pneg %p145
        $region30: #{bottleneck_pallas.1} parent=11 // pred_check_branch
          %242 = sbr.rel (%p240) target = $region32
        $region31: #{bottleneck_pallas.1} parent=11 // pred_region
          _
        $region32: #{bottleneck_pallas.1} parent=11 // pred_fallthru
          _
        // Predicated region
        $region33: #{bottleneck_pallas.1} parent=11 // pred_check
          %p243 = pneg %p166
        $region34: #{bottleneck_pallas.1} parent=11 // pred_check_branch
          %245 = sbr.rel (%p243) target = $region36
        $region35: #{bottleneck_pallas.1} parent=11 // pred_region
          _
        $region36: #{bottleneck_pallas.1} parent=11 // pred_fallthru
          _
        // Predicated region
        $region37: #{bottleneck_pallas.1} parent=11 // pred_check
          %p246 = pneg %p187
        $region38: #{bottleneck_pallas.1} parent=11 // pred_check_branch
          %248 = sbr.rel (%p246) target = $region40
        $region39: #{bottleneck_pallas.1} parent=11 // pred_region
          _
        $region40: #{bottleneck_pallas.1} parent=11 // pred_fallthru
          _
      $region12: #{bottleneck_pallas.1} parent=5 // pred_fallthru
        _
      %p249 = scmp.lt.s32.totalorder %s14, 2
      // Predicated region
      $region41: #{bottleneck_pallas.1} parent=5 // pred_check
        %p250 = pneg %p249
      $region42: #{bottleneck_pallas.1} parent=5 // pred_check_branch
        %252 = sbr.rel (%p250) target = $region44
      $region43: #{bottleneck_pallas.1} parent=5 // pred_region
        // Predicated region
        $region45: #{bottleneck_pallas.1} parent=43 // pred_check
          %p253 = pneg %p34
        $region46: #{bottleneck_pallas.1} parent=43 // pred_check_branch
          %255 = sbr.rel (%p253) target = $region48
        $region47: #{bottleneck_pallas.1} parent=43 // pred_region
          %s256 = sand.u32 %s24, 1
          %s257 = sand.u32 %s24, 1
          %s258 = smul.addr %s257, 64
          %s259 = scalar_lea.vmem [#allocation3], %s258
          %s260 = smul.u32 2, %s14
          %s261 = smul.addr %s260, 8
          %s262 = scalar_lea.vmem %s0, %s261
          // Predicated region
          $region49: #{bottleneck_pallas.1} parent=47 // pred_check
            _
          $region50: #{bottleneck_pallas.1} parent=47 // pred_check_branch
            %264 = sbr.rel (0) target = $region52
          $region51: #{bottleneck_pallas.1} parent=47 // pred_region
            // Predicated region
            $region53: #{bottleneck_pallas.1} parent=51 // pred_check
              _
            $region54: #{bottleneck_pallas.1} parent=51 // pred_check_branch
              %266 = sbr.rel (0) target = $region56
            $region55: #{bottleneck_pallas.1} parent=51 // pred_region
              loop: start=0, step=1, limit=1
              $region57: #{bottleneck_pallas.1} parent=55 // loop_pre_header
                _
              $region58: #{bottleneck_pallas.1} parent=55 // loop_header
                %s268 = sphi 0, %s272
                %p269 = scmp.ge.s32.totalorder %s268, 1
                %s273 = sphi %s262, %s262
                %s274 = sphi %s259, %s259
              $region59: #{bottleneck_pallas.1} parent=55 // loop_header_branch
                %271 = sbr.rel (%p269) target = $region63
              $region60: #{bottleneck_pallas.1} parent=55 // loop_body
                %v275 = vld [vmem:[%s273] sm:$0xff]
                %276 = vst [vmem:[%s274] sm:$0xff] %v275
                %v277 = vld [vmem:[%s273 + $0x8] sm:$0xff]
                %278 = vst [vmem:[%s274 + $0x8] sm:$0xff] %v277
                %v279 = vld [vmem:[%s273 + $0x20] sm:$0xff]
                %280 = vst [vmem:[%s274 + $0x10] sm:$0xff] %v279
                %v281 = vld [vmem:[%s273 + $0x28] sm:$0xff]
                %282 = vst [vmem:[%s274 + $0x18] sm:$0xff] %v281
                %v283 = vld [vmem:[%s273 + $0x40] sm:$0xff]
                %284 = vst [vmem:[%s274 + $0x20] sm:$0xff] %v283
                %v285 = vld [vmem:[%s273 + $0x48] sm:$0xff]
                %286 = vst [vmem:[%s274 + $0x28] sm:$0xff] %v285
                %v287 = vld [vmem:[%s273 + $0x60] sm:$0xff]
                %288 = vst [vmem:[%s274 + $0x30] sm:$0xff] %v287
                %v289 = vld [vmem:[%s273 + $0x68] sm:$0xff]
                %290 = vst [vmem:[%s274 + $0x38] sm:$0xff] %v289
              $region61: #{bottleneck_pallas.1} parent=55 // loop_footer
                %s272 = sadd.s32 1, %s268
              $region62: #{bottleneck_pallas.1} parent=55 // loop_footer_branch
                %267 = sbr.rel target = $region58
              $region63: #{bottleneck_pallas.1} parent=55 // loop_exit
                _
            $region56: #{bottleneck_pallas.1} parent=51 // pred_fallthru
              _
            // Predicated region
            $region64: #{bottleneck_pallas.1} parent=51 // pred_check
              _
            $region65: #{bottleneck_pallas.1} parent=51 // pred_check_branch
              %292 = sbr.rel target = $region67
            $region66: #{bottleneck_pallas.1} parent=51 // pred_region
              _
            $region67: #{bottleneck_pallas.1} parent=51 // pred_fallthru
              _
          $region52: #{bottleneck_pallas.1} parent=47 // pred_fallthru
            _
          %293 = vnop
        $region48: #{bottleneck_pallas.1} parent=43 // pred_fallthru
          _
      $region44: #{bottleneck_pallas.1} parent=5 // pred_fallthru
        _
      %p294 = scmp.le.s32.totalorder 1, %s14
      %p295 = scmp.lt.s32.totalorder %s14, 3
      %p296 = pnand %p294, %p295
      %p297 = pneg %p296
      // Predicated region
      $region68: #{bottleneck_pallas.1} parent=5 // pred_check
        _
      $region69: #{bottleneck_pallas.1} parent=5 // pred_check_branch
        %299 = sbr.rel (%p296) target = $region71
      $region70: #{bottleneck_pallas.1} parent=5 // pred_region
        %s300 = ssub.s32 %s14, 1
        %s301 = sand.u32 %s27, 1
        %s302 = sand.u32 %s27, 1
        %s303 = smul.addr %s302, 64
        %s304 = scalar_lea.vmem [#allocation3], %s303
        // Predicated region
        $region72: #{bottleneck_pallas.1} parent=70 // pred_check
          %p305 = pneg %p40
        $region73: #{bottleneck_pallas.1} parent=70 // pred_check_branch
          %307 = sbr.rel (%p305) target = $region75
        $region74: #{bottleneck_pallas.1} parent=70 // pred_region
          _
        $region75: #{bottleneck_pallas.1} parent=70 // pred_fallthru
          _
        %s308 = sand.u32 %s27, 1
        %s309 = sand.u32 %s27, 1
        %s310 = smul.addr %s309, 64
        %s311 = scalar_lea.vmem [#allocation3], %s310
        %p312 = pneg %p40
        %p313 = pneg %p37
        %p314 = pneg %p61
        %p315 = pneg %p58
        %p316 = pneg %p82
        %p317 = pneg %p79
        %p318 = pneg %p103
        %p319 = pneg %p100
        %p320 = pneg %p124
        %p321 = pneg %p121
        %p322 = pneg %p145
        %p323 = pneg %p142
        %p324 = pneg %p166
        %p325 = pneg %p163
        %p326 = pneg %p187
        %p327 = pneg %p184
        %p328 = pneg %p213
        %p329 = pneg %p210
        %s330 = sand.u32 %s200, 1
        %s331 = sand.u32 %s200, 1
        %s332 = smul.addr %s331, 64
        %s333 = scalar_lea.vmem [#allocation4], %s332
        %s334 = smul.u32 2, %s19
        %s335 = smul.u32 2, %s19
        %v337 = vld [vmem:[%s2] sm:$0xf]
        %v338 = vld [vmem:[%s304] sm:$0xff]
        %v339 = vld [vmem:[%s304 + $0x8] sm:$0xff]
        %v340 = vld [vmem:[%s304 + $0x10] sm:$0xff]
        %v341 = vld [vmem:[%s304 + $0x18] sm:$0xff]
        %v342 = vld [vmem:[%s304 + $0x20] sm:$0xff]
        %v343 = vld [vmem:[%s304 + $0x28] sm:$0xff]
        %v344 = vld [vmem:[%s304 + $0x30] sm:$0xff]
        %v345 = vld [vmem:[%s304 + $0x38] sm:$0xff]
        %v346 = vpack.c.bf16 %v340, %v338
        %v347 = vpack.c.bf16 %v341, %v339
        %v348 = vpack.c.bf16 %v344, %v342
        %v349 = vpack.c.bf16 %v345, %v343
        %v350 = vld [vmem:[%s3] sm:$0xff]
        %352 = vset.pattern.permute.xlu0 0
        %353 = vperm.xlu0 %352, %v350
        %v354 = vpop.permute.xlu0 %353
        %vm356 = vcmask 261120
        %v358 = vsel %vm356, %v337, 0
        %360 = vmatpush.bf16.msra.mxu0 0
        %361 = vmatpush.bf16.msra.mxu0 0
        %362 = vmatpush.bf16.msra.mxu0 0
        %363 = vmatpush.bf16.msra.mxu0 0
        %364 = vmatpush.bf16.msra.mxu0 0
        %365 = vmatpush.bf16.msra.mxu0 0
        %366 = vmatpush.bf16.msra.mxu0 %v348
        %367 = vmatpush.bf16.msra.mxu0 %v346
        %368 = vmatmul.bf16.gmra.mxu0 %v358
        %v369 = vpop.f32.mrf.mxu0
        %v370 = vadd.f32 %v354, %v369
        %v371 = vpop.f32.mrf.mxu0
        %372 = vdwg.mxu0
        %373 = vmatpush.bf16.msra.mxu0 0
        %374 = vmatpush.bf16.msra.mxu0 0
        %375 = vmatpush.bf16.msra.mxu0 0
        %376 = vmatpush.bf16.msra.mxu0 0
        %377 = vmatpush.bf16.msra.mxu0 0
        %378 = vmatpush.bf16.msra.mxu0 0
        %379 = vmatpush.bf16.msra.mxu0 %v349
        %380 = vmatpush.bf16.msra.mxu0 %v347
        %381 = vmatmul.bf16.gmra.mxu0 %v358
        %v382 = vpop.f32.mrf.mxu0
        %v383 = vadd.f32 %v354, %v382
        %v384 = vpop.f32.mrf.mxu0
        %385 = vdwg.mxu0
        %v386 = vmax.f32 %v370, 0.0
        %v387 = vmax.f32 %v383, 0.0
        %388 = vrot.lane.b32.xlu0 %v386, 17
        %v389 = vpop.permute.xlu0 %388
        %390 = vrot.lane.b32.xlu0 %v387, 17
        %v391 = vpop.permute.xlu0 %390
        %v392 = vlaneseq
        %v393 = vand.u32 %v392, 127
        %vm394 = vcmp.lt.s32.totalorder %v393, 17
        %v395 = vsel %vm394, %v389, %v391
        %v396 = vsel %vm394, %v391, %v389
        %v397 = vld [vmem:[%s1] ss:$8 sm:$0x3]
        %v399 = vperm.slane %v397, 0
        %v400 = vperm.slane %v397, 1
        %v403 = vmul.f32 %v396, %v399
        %v404 = vmul.f32 %v395, %v400
        %405 = vst [vmem:[#allocation2] sm:$0xff] %v403
        %406 = vst [vmem:[#allocation2 + $0x8] sm:$0xff] %v404
        %407 = vrot.lane.b32.xlu0 %v386, 16
        %v408 = vpop.permute.xlu0 %407
        %409 = vrot.lane.b32.xlu0 %v387, 16
        %v410 = vpop.permute.xlu0 %409
        %vm411 = vcmp.lt.s32.totalorder %v393, 16
        %v412 = vsel %vm411, %v408, %v410
        %v413 = vsel %vm411, %v410, %v408
        %s414 = scalar_lea.vmem %s1, 1
        %v415 = vld [vmem:[%s414] ss:$8 sm:$0x3]
        %v417 = vperm.slane %v415, 0
        %v418 = vperm.slane %v415, 1
        %v421 = vmul.f32 %v413, %v417
        %v422 = vmul.f32 %v412, %v418
        %423 = vst [vmem:[#allocation2 + $0x10] sm:$0xff] %v421
        %424 = vst [vmem:[#allocation2 + $0x18] sm:$0xff] %v422
        %425 = vrot.lane.b32.xlu0 %v386, 15
        %v426 = vpop.permute.xlu0 %425
        %427 = vrot.lane.b32.xlu0 %v387, 15
        %v428 = vpop.permute.xlu0 %427
        %vm429 = vcmp.lt.s32.totalorder %v393, 15
        %v430 = vsel %vm429, %v426, %v428
        %v431 = vsel %vm429, %v428, %v426
        %s432 = scalar_lea.vmem %s1, 2
        %v433 = vld [vmem:[%s432] ss:$8 sm:$0x3]
        %v435 = vperm.slane %v433, 0
        %v436 = vperm.slane %v433, 1
        %v439 = vmul.f32 %v431, %v435
        %v440 = vmul.f32 %v430, %v436
        %441 = vst [vmem:[#allocation2 + $0x20] sm:$0xff] %v439
        %442 = vst [vmem:[#allocation2 + $0x28] sm:$0xff] %v440
        %443 = vrot.lane.b32.xlu0 %v386, 1
        %v444 = vpop.permute.xlu0 %443
        %445 = vrot.lane.b32.xlu0 %v387, 1
        %v446 = vpop.permute.xlu0 %445
        %vm447 = vcmp.lt.s32.totalorder %v393, 1
        %v448 = vsel %vm447, %v444, %v446
        %v449 = vsel %vm447, %v446, %v444
        %s450 = scalar_lea.vmem %s1, 3
        %v451 = vld [vmem:[%s450] ss:$8 sm:$0x3]
        %v453 = vperm.slane %v451, 0
        %v454 = vperm.slane %v451, 1
        %v457 = vmul.f32 %v449, %v453
        %v458 = vmul.f32 %v448, %v454
        %459 = vst [vmem:[#allocation2 + $0x30] sm:$0xff] %v457
        %460 = vst [vmem:[#allocation2 + $0x38] sm:$0xff] %v458
        %461 = vst [vmem:[#allocation2 + $0x40] sm:$0xff] %v386
        %462 = vst [vmem:[#allocation2 + $0x48] sm:$0xff] %v387
        %463 = vrot.lane.b32.xlu0 %v386, 127
        %v464 = vpop.permute.xlu0 %463
        %465 = vrot.lane.b32.xlu0 %v387, 127
        %v466 = vpop.permute.xlu0 %465
        %vm467 = vcmp.lt.s32.totalorder %v393, 127
        %v468 = vsel %vm467, %v464, %v466
        %v469 = vsel %vm467, %v466, %v464
        %s470 = scalar_lea.vmem %s1, 4
        %v471 = vld [vmem:[%s470] ss:$8 sm:$0x3]
        %v473 = vperm.slane %v471, 0
        %v474 = vperm.slane %v471, 1
        %v477 = vmul.f32 %v468, %v473
        %v478 = vmul.f32 %v469, %v474
        %479 = vst [vmem:[#allocation2 + $0x50] sm:$0xff] %v477
        %480 = vst [vmem:[#allocation2 + $0x58] sm:$0xff] %v478
        %481 = vrot.lane.b32.xlu0 %v386, 113
        %v482 = vpop.permute.xlu0 %481
        %483 = vrot.lane.b32.xlu0 %v387, 113
        %v484 = vpop.permute.xlu0 %483
        %vm485 = vcmp.lt.s32.totalorder %v393, 113
        %v486 = vsel %vm485, %v482, %v484
        %v487 = vsel %vm485, %v484, %v482
        %s488 = scalar_lea.vmem %s1, 5
        %v489 = vld [vmem:[%s488] ss:$8 sm:$0x3]
        %v491 = vperm.slane %v489, 0
        %v492 = vperm.slane %v489, 1
        %v495 = vmul.f32 %v486, %v491
        %v496 = vmul.f32 %v487, %v492
        %497 = vst [vmem:[#allocation2 + $0x60] sm:$0xff] %v495
        %498 = vst [vmem:[#allocation2 + $0x68] sm:$0xff] %v496
        %499 = vrot.lane.b32.xlu0 %v386, 112
        %v500 = vpop.permute.xlu0 %499
        %501 = vrot.lane.b32.xlu0 %v387, 112
        %v502 = vpop.permute.xlu0 %501
        %vm503 = vcmp.lt.s32.totalorder %v393, 112
        %v504 = vsel %vm503, %v500, %v502
        %v505 = vsel %vm503, %v502, %v500
        %s506 = scalar_lea.vmem %s1, 6
        %v507 = vld [vmem:[%s506] ss:$8 sm:$0x3]
        %v509 = vperm.slane %v507, 0
        %v510 = vperm.slane %v507, 1
        %v513 = vmul.f32 %v504, %v509
        %v514 = vmul.f32 %v505, %v510
        %515 = vst [vmem:[#allocation2 + $0x70] sm:$0xff] %v513
        %516 = vst [vmem:[#allocation2 + $0x78] sm:$0xff] %v514
        %517 = vrot.lane.b32.xlu0 %v386, 111
        %v518 = vpop.permute.xlu0 %517
        %519 = vrot.lane.b32.xlu0 %v387, 111
        %v520 = vpop.permute.xlu0 %519
        %vm521 = vcmp.lt.s32.totalorder %v393, 111
        %v522 = vsel %vm521, %v518, %v520
        %v523 = vsel %vm521, %v520, %v518
        %s524 = scalar_lea.vmem %s1, 7
        %v525 = vld [vmem:[%s524] ss:$8 sm:$0x3]
        %v527 = vperm.slane %v525, 0
        %v528 = vperm.slane %v525, 1
        %v531 = vmul.f32 %v522, %v527
        %v532 = vmul.f32 %v523, %v528
        %533 = vst [vmem:[#allocation2 + $0x80] sm:$0xff] %v531
        %534 = vst [vmem:[#allocation2 + $0x88] sm:$0xff] %v532
        %v535 = vld [vmem:[%s4] sm:$0xf]
        %v536 = vld [vmem:[#allocation2] sm:$0xff]
        %v537 = vld [vmem:[#allocation2 + $0x8] sm:$0xff]
        %v538 = vld [vmem:[#allocation2 + $0x10] sm:$0xff]
        %v539 = vld [vmem:[#allocation2 + $0x18] sm:$0xff]
        %v540 = vld [vmem:[#allocation2 + $0x20] sm:$0xff]
        %v541 = vld [vmem:[#allocation2 + $0x28] sm:$0xff]
        %v542 = vld [vmem:[#allocation2 + $0x30] sm:$0xff]
        %v543 = vld [vmem:[#allocation2 + $0x38] sm:$0xff]
        %v544 = vld [vmem:[#allocation2 + $0x40] sm:$0xff]
        %v545 = vld [vmem:[#allocation2 + $0x48] sm:$0xff]
        %v546 = vld [vmem:[#allocation2 + $0x50] sm:$0xff]
        %v547 = vld [vmem:[#allocation2 + $0x58] sm:$0xff]
        %v548 = vld [vmem:[#allocation2 + $0x60] sm:$0xff]
        %v549 = vld [vmem:[#allocation2 + $0x68] sm:$0xff]
        %v550 = vld [vmem:[#allocation2 + $0x70] sm:$0xff]
        %v551 = vld [vmem:[#allocation2 + $0x78] sm:$0xff]
        %v552 = vld [vmem:[#allocation2 + $0x80] sm:$0xff]
        %v553 = vld [vmem:[#allocation2 + $0x88] sm:$0xff]
        %v554 = vpack.c.bf16 %v538, %v536
        %v555 = vpack.c.bf16 %v539, %v537
        %v556 = vpack.c.bf16 %v542, %v540
        %v557 = vpack.c.bf16 %v543, %v541
        %v558 = vpack.c.bf16 %v546, %v544
        %v559 = vpack.c.bf16 %v547, %v545
        %v560 = vpack.c.bf16 %v550, %v548
        %v561 = vpack.c.bf16 %v551, %v549
        %v562 = vpack.c.bf16 %v552, %v552
        %v563 = vpack.c.bf16 %v553, %v553
        %v564 = vld [vmem:[%s5] sm:$0xff]
        %566 = vset.pattern.permute.xlu0 0
        %567 = vperm.xlu0 %566, %v564
        %v568 = vpop.permute.xlu0 %567
        %vm570 = vcmask 588800
        %v572 = vsel %vm570, %v535, 0
        %vm574 = vcmask 1043456
        %v576 = vsel %vm574, %v562, 0
        %v579 = vsel %vm574, %v563, 0
        %581 = vmatpush.bf16.msra.mxu0 0
        %582 = vmatpush.bf16.msra.mxu0 0
        %583 = vmatpush.bf16.msra.mxu0 0
        %584 = vmatpush.bf16.msra.mxu0 %v576
        %585 = vmatpush.bf16.msra.mxu0 %v560
        %586 = vmatpush.bf16.msra.mxu0 %v558
        %587 = vmatpush.bf16.msra.mxu0 %v556
        %588 = vmatpush.bf16.msra.mxu0 %v554
        %589 = vmatmul.bf16.gmra.mxu0 %v572
        %v590 = vpop.f32.mrf.mxu0
        %v591 = vadd.f32 %v568, %v590
        %v592 = vpop.f32.mrf.mxu0
        %593 = vdwg.mxu0
        %594 = vmatpush.bf16.msra.mxu0 0
        %595 = vmatpush.bf16.msra.mxu0 0
        %596 = vmatpush.bf16.msra.mxu0 0
        %597 = vmatpush.bf16.msra.mxu0 %v579
        %598 = vmatpush.bf16.msra.mxu0 %v561
        %599 = vmatpush.bf16.msra.mxu0 %v559
        %600 = vmatpush.bf16.msra.mxu0 %v557
        %601 = vmatpush.bf16.msra.mxu0 %v555
        %602 = vmatmul.bf16.gmra.mxu0 %v572
        %v603 = vpop.f32.mrf.mxu0
        %v604 = vadd.f32 %v568, %v603
        %v605 = vpop.f32.mrf.mxu0
        %606 = vdwg.mxu0
        %v607 = vmax.f32 %v591, 0.0
        %v608 = vmax.f32 %v604, 0.0
        %v609 = vld [vmem:[%s6] sm:$0xf]
        %v610 = vld [vmem:[%s6 + $0x4] sm:$0xf]
        %v611 = vld [vmem:[%s6 + $0x8] sm:$0xf]
        %v612 = vld [vmem:[%s6 + $0xc] sm:$0xf]
        %v613 = vpack.c.bf16 %v607, %v607
        %v614 = vpack.c.bf16 %v608, %v608
        %v615 = vld [vmem:[%s7] sm:$0xff]
        %v616 = vld [vmem:[%s7 + $0x8] sm:$0xff]
        %v617 = vld [vmem:[%s7 + $0x10] sm:$0xff]
        %v618 = vld [vmem:[%s7 + $0x18] sm:$0xff]
        %620 = vset.pattern.permute.xlu0 0
        %621 = vperm.xlu0 %620, %v615
        %v622 = vpop.permute.xlu0 %621
        %625 = vset.pattern.permute.xlu0 0
        %626 = vperm.xlu0 %625, %v616
        %v627 = vpop.permute.xlu0 %626
        %630 = vset.pattern.permute.xlu0 0
        %631 = vperm.xlu0 %630, %v617
        %v632 = vpop.permute.xlu0 %631
        %635 = vset.pattern.permute.xlu0 0
        %636 = vperm.xlu0 %635, %v618
        %v637 = vpop.permute.xlu0 %636
        %v643 = vunpack.c.l.b16 %v609
        %v644 = vunpack.c.l.b16 %v610
        %v645 = vunpack.c.l.b16 %v611
        %v646 = vunpack.c.l.b16 %v612
        %v647 = vpack.c.b16 %v644, %v643
        %v648 = vpack.c.b16 %v646, %v645
        %vm649 = vcmask 64512
        %v651 = vsel %vm649, %v647, 0
        %v654 = vsel %vm649, %v648, 0
        %v657 = vsel %vm574, %v613, 0
        %v660 = vsel %vm574, %v614, 0
        %662 = vmatpush.bf16.msra.mxu0 0
        %663 = vmatpush.bf16.msra.mxu0 0
        %664 = vmatpush.bf16.msra.mxu0 0
        %665 = vmatpush.bf16.msra.mxu0 0
        %666 = vmatpush.bf16.msra.mxu0 0
        %667 = vmatpush.bf16.msra.mxu0 0
        %668 = vmatpush.bf16.msra.mxu0 0
        %669 = vmatpush.bf16.msra.mxu0 %v657
        %670 = vmatmul.bf16.gmra.mxu0 %v651
        %v671 = vpop.f32.mrf.mxu0
        %v672 = vadd.f32 %v622, %v671
        %v673 = vpop.f32.mrf.mxu0
        %v674 = vadd.f32 %v627, %v673
        %675 = vmatmul.bf16.gmra.mxu0 %v654
        %v676 = vpop.f32.mrf.mxu0
        %v677 = vadd.f32 %v632, %v676
        %v678 = vpop.f32.mrf.mxu0
        %v679 = vadd.f32 %v637, %v678
        %680 = vdwg.mxu0
        %681 = vmatpush.bf16.msra.mxu0 0
        %682 = vmatpush.bf16.msra.mxu0 0
        %683 = vmatpush.bf16.msra.mxu0 0
        %684 = vmatpush.bf16.msra.mxu0 0
        %685 = vmatpush.bf16.msra.mxu0 0
        %686 = vmatpush.bf16.msra.mxu0 0
        %687 = vmatpush.bf16.msra.mxu0 0
        %688 = vmatpush.bf16.msra.mxu0 %v660
        %689 = vmatmul.bf16.gmra.mxu0 %v651
        %v690 = vpop.f32.mrf.mxu0
        %v691 = vadd.f32 %v622, %v690
        %v692 = vpop.f32.mrf.mxu0
        %v693 = vadd.f32 %v627, %v692
        %694 = vmatmul.bf16.gmra.mxu0 %v654
        %v695 = vpop.f32.mrf.mxu0
        %v696 = vadd.f32 %v632, %v695
        %v697 = vpop.f32.mrf.mxu0
        %v698 = vadd.f32 %v637, %v697
        %699 = vdwg.mxu0
        %v700 = vld [vmem:[%s304] sm:$0xff]
        %v701 = vld [vmem:[%s304 + $0x8] sm:$0xff]
        %v702 = vld [vmem:[%s304 + $0x10] sm:$0xff]
        %v703 = vld [vmem:[%s304 + $0x18] sm:$0xff]
        %v704 = vld [vmem:[%s304 + $0x20] sm:$0xff]
        %v705 = vld [vmem:[%s304 + $0x28] sm:$0xff]
        %v706 = vld [vmem:[%s304 + $0x30] sm:$0xff]
        %v707 = vld [vmem:[%s304 + $0x38] sm:$0xff]
        %v708 = vadd.f32 %v672, %v700
        %v709 = vadd.f32 %v691, %v701
        %v710 = vadd.f32 %v674, %v702
        %v711 = vadd.f32 %v693, %v703
        %v712 = vadd.f32 %v677, %v704
        %v713 = vadd.f32 %v696, %v705
        %v714 = vadd.f32 %v679, %v706
        %v715 = vadd.f32 %v698, %v707
        %v716 = vmax.f32 %v708, 0.0
        %v717 = vmax.f32 %v709, 0.0
        %v718 = vmax.f32 %v710, 0.0
        %v719 = vmax.f32 %v711, 0.0
        %v720 = vmax.f32 %v712, 0.0
        %v721 = vmax.f32 %v713, 0.0
        %v722 = vmax.f32 %v714, 0.0
        %v723 = vmax.f32 %v715, 0.0
        %724 = vst [vmem:[%s333] sm:$0xff] %v716
        %725 = vst [vmem:[%s333 + $0x8] sm:$0xff] %v717
        %726 = vst [vmem:[%s333 + $0x10] sm:$0xff] %v718
        %727 = vst [vmem:[%s333 + $0x18] sm:$0xff] %v719
        %728 = vst [vmem:[%s333 + $0x20] sm:$0xff] %v720
        %729 = vst [vmem:[%s333 + $0x28] sm:$0xff] %v721
        %730 = vst [vmem:[%s333 + $0x30] sm:$0xff] %v722
        %731 = vst [vmem:[%s333 + $0x38] sm:$0xff] %v723
        %s732 = sand.u32 %s200, 1
        %s733 = sand.u32 %s200, 1
        %s734 = smul.addr %s733, 64
        %s735 = scalar_lea.vmem [#allocation4], %s734
        // Predicated region
        $region76: #{bottleneck_pallas.1} parent=70 // pred_check
          %p736 = pneg %p210
        $region77: #{bottleneck_pallas.1} parent=70 // pred_check_branch
          %738 = sbr.rel (%p736) target = $region79
        $region78: #{bottleneck_pallas.1} parent=70 // pred_region
          %s739 = smul.u32 2, %s19
          %s740 = smul.addr %s739, 8
          %s741 = scalar_lea.vmem %s8, %s740
          // Predicated region
          $region80: #{bottleneck_pallas.1} parent=78 // pred_check
            _
          $region81: #{bottleneck_pallas.1} parent=78 // pred_check_branch
            %743 = sbr.rel (0) target = $region83
          $region82: #{bottleneck_pallas.1} parent=78 // pred_region
            // Predicated region
            $region84: #{bottleneck_pallas.1} parent=82 // pred_check
              _
            $region85: #{bottleneck_pallas.1} parent=82 // pred_check_branch
              %745 = sbr.rel (0) target = $region87
            $region86: #{bottleneck_pallas.1} parent=82 // pred_region
              loop: start=0, step=1, limit=1
              $region88: #{bottleneck_pallas.1} parent=86 // loop_pre_header
                _
              $region89: #{bottleneck_pallas.1} parent=86 // loop_header
                %s747 = sphi 0, %s751
                %p748 = scmp.ge.s32.totalorder %s747, 1
                %s752 = sphi %s735, %s735
                %s753 = sphi %s741, %s741
              $region90: #{bottleneck_pallas.1} parent=86 // loop_header_branch
                %750 = sbr.rel (%p748) target = $region94
              $region91: #{bottleneck_pallas.1} parent=86 // loop_body
                %v754 = vld [vmem:[%s752] sm:$0xff]
                %755 = vst [vmem:[%s753] sm:$0xff] %v754
                %v756 = vld [vmem:[%s752 + $0x8] sm:$0xff]
                %757 = vst [vmem:[%s753 + $0x8] sm:$0xff] %v756
                %v758 = vld [vmem:[%s752 + $0x10] sm:$0xff]
                %759 = vst [vmem:[%s753 + $0x20] sm:$0xff] %v758
                %v760 = vld [vmem:[%s752 + $0x18] sm:$0xff]
                %761 = vst [vmem:[%s753 + $0x28] sm:$0xff] %v760
                %v762 = vld [vmem:[%s752 + $0x20] sm:$0xff]
                %763 = vst [vmem:[%s753 + $0x40] sm:$0xff] %v762
                %v764 = vld [vmem:[%s752 + $0x28] sm:$0xff]
                %765 = vst [vmem:[%s753 + $0x48] sm:$0xff] %v764
                %v766 = vld [vmem:[%s752 + $0x30] sm:$0xff]
                %767 = vst [vmem:[%s753 + $0x60] sm:$0xff] %v766
                %v768 = vld [vmem:[%s752 + $0x38] sm:$0xff]
                %769 = vst [vmem:[%s753 + $0x68] sm:$0xff] %v768
              $region92: #{bottleneck_pallas.1} parent=86 // loop_footer
                %s751 = sadd.s32 1, %s747
              $region93: #{bottleneck_pallas.1} parent=86 // loop_footer_branch
                %746 = sbr.rel target = $region89
              $region94: #{bottleneck_pallas.1} parent=86 // loop_exit
                _
            $region87: #{bottleneck_pallas.1} parent=82 // pred_fallthru
              _
            // Predicated region
            $region95: #{bottleneck_pallas.1} parent=82 // pred_check
              _
            $region96: #{bottleneck_pallas.1} parent=82 // pred_check_branch
              %771 = sbr.rel target = $region98
            $region97: #{bottleneck_pallas.1} parent=82 // pred_region
              _
            $region98: #{bottleneck_pallas.1} parent=82 // pred_fallthru
              _
          $region83: #{bottleneck_pallas.1} parent=78 // pred_fallthru
            _
          %772 = vnop
        $region79: #{bottleneck_pallas.1} parent=70 // pred_fallthru
          _
      $region71: #{bottleneck_pallas.1} parent=5 // pred_fallthru
        _
      %p773 = scmp.le.s32.totalorder 2, %s14
      // Predicated region
      $region99: #{bottleneck_pallas.1} parent=5 // pred_check
        %p774 = pneg %p773
      $region100: #{bottleneck_pallas.1} parent=5 // pred_check_branch
        %776 = sbr.rel (%p774) target = $region102
      $region101: #{bottleneck_pallas.1} parent=5 // pred_region
        %s777 = ssub.s32 %s14, 2
        // Predicated region
        $region103: #{bottleneck_pallas.1} parent=101 // pred_check
          %p778 = pneg %p216
        $region104: #{bottleneck_pallas.1} parent=101 // pred_check_branch
          %780 = sbr.rel (%p778) target = $region106
        $region105: #{bottleneck_pallas.1} parent=101 // pred_region
          %s781 = sand.u32 %s201, 1
          %s782 = sand.u32 %s201, 1
          %s783 = smul.addr %s782, 64
          %s784 = scalar_lea.vmem [#allocation4], %s783
        $region106: #{bottleneck_pallas.1} parent=101 // pred_fallthru
          _
      $region102: #{bottleneck_pallas.1} parent=5 // pred_fallthru
        _
    $region6: #{bottleneck_pallas.1} parent=1 // loop_footer
      %s18 = sadd.s32 1, %s14
    $region7: #{bottleneck_pallas.1} parent=1 // loop_footer_branch
      %13 = sbr.rel target = $region3
    $region8: #{bottleneck_pallas.1} parent=1 // loop_exit
      _

</llo_original>
